<compile_context>
chip_gen: v7x
topology: tpu7x:2x2x1
jax: 0.10.0
libtpu: 0.0.40
codegen_flags: <defaults>
</compile_context>

<pallas_src>
import jax
import jax.numpy as jnp
from jax.experimental import pallas as pl
from jax.experimental.pallas import tpu as pltpu


# ----------------------------------------------------------------------------
# Kernels
# ----------------------------------------------------------------------------
def _linear_single_block_kernel(x_ref, w_ref, b_ref, o_ref):
    o_ref[...] = (
        jnp.dot(x_ref[...], w_ref[...], preferred_element_type=jnp.float32)
        + b_ref[...]
    ).astype(o_ref.dtype)


def _linear_tiled_kernel_f32(x_ref, w_ref, b_ref, o_ref):
    # Output block index is constant along k, so o_ref stays resident in VMEM
    # across the K loop and doubles as the f32 accumulator.
    k = pl.program_id(2)

    @pl.when(k == 0)
    def _():
        o_ref[...] = jnp.broadcast_to(b_ref[...], o_ref.shape)

    o_ref[...] += jnp.dot(
        x_ref[...], w_ref[...], preferred_element_type=jnp.float32
    )


def _linear_tiled_kernel_acc(x_ref, w_ref, b_ref, o_ref, acc_ref):
    # Variant for non-f32 output dtypes: accumulate in f32 scratch, cast once.
    k = pl.program_id(2)

    @pl.when(k == 0)
    def _():
        acc_ref[...] = jnp.broadcast_to(
            b_ref[...].astype(jnp.float32), acc_ref.shape
        )

    acc_ref[...] += jnp.dot(
        x_ref[...], w_ref[...], preferred_element_type=jnp.float32
    )

    @pl.when(k == pl.num_programs(2) - 1)
    def _():
        o_ref[...] = acc_ref[...].astype(o_ref.dtype)


# ----------------------------------------------------------------------------
# Helpers
# ----------------------------------------------------------------------------
def _round_up(x: int, m: int) -> int:
    return ((x + m - 1) // m) * m


def _pick_tile(dim: int, align: int, max_tile: int, waste_frac: float = 0.125):
    """Pick the largest tile (multiple of `align`, <= `max_tile`) for `dim`
    that does not pad the dimension by more than `waste_frac`.
    Returns (tile, padded_dim) with padded_dim % tile == 0."""
    padded = _round_up(dim, align)
    max_tile = max(align, (max_tile // align) * align)
    if padded <= max_tile:
        return padded, padded  # single tile along this axis, minimal padding
    best = (align, _round_up(padded, align))
    t = max_tile
    while True:
        p = _round_up(padded, t)
        if p - padded <= int(waste_frac * p):
            return t, p
        if p < best[1]:
            best = (t, p)
        if t == align:
            break
        t = max(align, ((t // 2) // align) * align)
    return best


def _vmem_limit_bytes() -> int:
    # Generation-aware scoped-VMEM budget: ~75% of physical per-core VMEM,
    # capped at 96 MiB (v5e/v6e: 128 MiB -> 96 MiB, v7x: 64 MiB -> 48 MiB).
    cap = 64 * 1024 * 1024
    try:
        info = pltpu.get_tpu_info()
        cap = int(getattr(info, "vmem_capacity_bytes", cap) or cap)
    except Exception:
        pass
    return min(96 * 1024 * 1024, (cap * 3) // 4)


# ----------------------------------------------------------------------------
# Wrapper
# ----------------------------------------------------------------------------
def linear_forward(x, w, b):
    """y = x @ w + b with the numpy module's forward semantics."""
    orig_shape = x.shape
    if x.ndim < 2:
        x = x.reshape(1, -1)
    elif x.ndim > 2:
        x = x.reshape(-1, x.shape[-1])  # collapse leading batch dims

    B, K = x.shape
    K2, N = w.shape
    assert K == K2, f"in_features mismatch: {K} vs {K2}"
    out_dtype = x.dtype
    itemsize = jnp.dtype(x.dtype).itemsize

    def _restore(out2d):
        if len(orig_shape) > 2:
            return out2d.reshape(orig_shape[:-1] + (N,))
        return out2d

    # ------------------ single-block fast path ------------------
    # Whole problem (with internal (8,128) layout padding) comfortably fits in
    # VMEM: no padding, no grid, no pipeline setup overhead.
    B8, K8 = _round_up(B, 8), _round_up(K, 8)
    K128, N128 = _round_up(K, 128), _round_up(N, 128)
    footprint = (B8 * K128 + K8 * N128 + B8 * N128 + N128) * max(itemsize, 4)
    if footprint <= 4 * 1024 * 1024:
        out = pl.pallas_call(
            _linear_single_block_kernel,
            out_shape=jax.ShapeDtypeStruct((B, N), out_dtype),
        )(x, w, b.reshape(1, N))
        return _restore(out)

    # ------------------ tiled path ------------------
    vmem_limit = _vmem_limit_bytes()
    tile_budget = (vmem_limit * 7) // 10  # headroom for compiler scratch

    # M aligned to sublanes (8); N, K aligned to lanes (128).
    tm, Bp = _pick_tile(B, 8, 512)
    tn, Np = _pick_tile(N, 128, 512)

    # v7x has 2 TensorCores sharded over the "parallel" grid axes; keep at
    # least one parallel axis with >= 2 iterations when it is cheap to do so.
    if Bp // tm == 1 and Np // tn == 1 and tn % 256 == 0:
        tn //= 2

    out_itemsize = jnp.dtype(out_dtype).itemsize
    resident = 2 * tm * tn * out_itemsize + tm * tn * 4 + 2 * tn * 4
    tk_cap = max(128, (tile_budget - resident) // (2 * (tm + tn) * itemsize))
    tk, Kp = _pick_tile(K, 128, min(2048, tk_cap))

    # Zero-pad to tile multiples only if the shape is actually ragged.
    xp = x if (Bp, Kp) == (B, K) else jnp.pad(x, ((0, Bp - B), (0, Kp - K)))
    wp = w if (Kp, Np) == (K, N) else jnp.pad(w, ((0, Kp - K), (0, Np - N)))
    bp = b if Np == N else jnp.pad(b, (0, Np - N))
    b2d = bp.astype(jnp.float32).reshape(1, Np)

    grid = (Bp // tm, Np // tn, Kp // tk)

    if jnp.dtype(out_dtype) == jnp.dtype(jnp.float32):
        kernel = _linear_tiled_kernel_f32  # accumulate straight into o_ref
        scratch_shapes = []
    else:
        kernel = _linear_tiled_kernel_acc
        scratch_shapes = [pltpu.VMEM((tm, tn), jnp.float32)]

    # Advisory cost model including HBM re-read factors.
    cost = pl.CostEstimate(
        flops=2 * Bp * Kp * Np,
        bytes_accessed=(
            Bp * Kp * (Np // tn) + Kp * Np * (Bp // tm) + Bp * Np + Np
        )
        * itemsize,
        transcendentals=0,
    )

    out = pl.pallas_call(
        kernel,
        out_shape=jax.ShapeDtypeStruct((Bp, Np), out_dtype),
        grid_spec=pltpu.PrefetchScalarGridSpec(
            num_scalar_prefetch=0,
            grid=grid,
            in_specs=[
                pl.BlockSpec((tm, tk), lambda i, j, k: (i, k)),
                pl.BlockSpec((tk, tn), lambda i, j, k: (k, j)),
                pl.BlockSpec((1, tn), lambda i, j, k: (0, j)),
            ],
            out_specs=pl.BlockSpec((tm, tn), lambda i, j, k: (i, j)),
            scratch_shapes=scratch_shapes,
        ),
        compiler_params=pltpu.CompilerParams(
            # M, N independent (megacore-shardable); K carries the accumulator.
            dimension_semantics=("parallel", "parallel", "arbitrary"),
            vmem_limit_bytes=int(vmem_limit),
        ),
        cost_estimate=cost,
    )(xp, wp, b2d)

    return _restore(out[:B, :N])


# ----------------------------------------------------------------------------
# Self-test
# ----------------------------------------------------------------------------
if __name__ == "__main__":
    key = jax.random.PRNGKey(0)
    kx, kw, kb, kx2, kw2, kb2, kx3 = jax.random.split(key, 7)
    HIGHEST = jax.lax.Precision.HIGHEST

    # --- 1) toy shape from the module's usage (single-block fast path) ---
    in_features, out_features, batch = 32, 16, 8
    x = jax.random.normal(kx, (batch, in_features), dtype=jnp.float32)
    w = jax.random.normal(kw, (in_features, out_features), dtype=jnp.float32) / (
        (in_features + out_features) ** 0.5
    )
    b = jax.random.normal(kb, (out_features,), dtype=jnp.float32)

    y = linear_forward(x, w, b)
    jax.block_until_ready(y)
    y_ref = jnp.dot(x, w, precision=HIGHEST) + b
    assert y.shape == (batch, out_features)
    assert jnp.allclose(y, y_ref, atol=1e-5, rtol=1e-5)

    # --- 2) 3-D input: leading batch dims collapsed, like np.dot semantics ---
    x3 = jax.random.normal(kx3, (2, 5, in_features), dtype=jnp.float32)
    y3 = linear_forward(x3, w, b)
    jax.block_until_ready(y3)
    y3_ref = jnp.dot(x3, w, precision=HIGHEST) + b
    assert y3.shape == (2, 5, out_features)
    assert jnp.allclose(y3, y3_ref, atol=1e-5, rtol=1e-5)

    # --- 3) larger, non-aligned shape exercising the tiled/padded path ---
    B2, K2, N2 = 300, 1100, 1300
    x2 = jax.random.normal(kx2, (B2, K2), dtype=jnp.float32)
    w2 = jax.random.normal(kw2, (K2, N2), dtype=jnp.float32) / ((K2 + N2) ** 0.5)
    b2 = jax.random.normal(kb2, (N2,), dtype=jnp.float32)

    y2 = linear_forward(x2, w2, b2)
    jax.block_until_ready(y2)
    y2_ref = jnp.dot(x2, w2, precision=HIGHEST) + b2
    assert y2.shape == (B2, N2)
    assert jnp.allclose(y2, y2_ref, atol=1e-3, rtol=1e-3)

    print("KERNEL_OK")
</pallas_src>

<mosaic_0001>
module attributes {stable_mosaic.version = 11 : i64} {
  func.func @_linear_single_block_kernel(%arg0: memref<8x32xf32, #tpu.memory_space<vmem>>, %arg1: memref<32x16xf32, #tpu.memory_space<vmem>>, %arg2: memref<1x16xf32, #tpu.memory_space<vmem>>, %arg3: memref<8x16xf32, #tpu.memory_space<vmem>>) attributes {dimension_semantics = [], scalar_prefetch = 0 : i64, scratch_operands = 0 : i64, tpu.core_type = #tpu.core_type<tc>} {
    %c0 = arith.constant 0 : index
    %c0_0 = arith.constant 0 : index
    %0 = vector.load %arg0[%c0, %c0_0] : memref<8x32xf32, #tpu.memory_space<vmem>>, vector<8x32xf32>
    %c0_1 = arith.constant 0 : index
    %c0_2 = arith.constant 0 : index
    %1 = vector.load %arg1[%c0_1, %c0_2] : memref<32x16xf32, #tpu.memory_space<vmem>>, vector<32x16xf32>
    %cst = arith.constant dense<0.000000e+00> : vector<8x16xf32>
    %2 = tpu.matmul %0, %1, %cst {dimension_numbers = #tpu.dot_dimension_numbers<[1], [0], [0], [1], [0, 0, 1, 1], [], []>} : vector<8x32xf32>, vector<32x16xf32>, vector<8x16xf32> -> vector<8x16xf32>
    %c0_3 = arith.constant 0 : index
    %c0_4 = arith.constant 0 : index
    %3 = vector.load %arg2[%c0_3, %c0_4] : memref<1x16xf32, #tpu.memory_space<vmem>>, vector<1x16xf32>
    %4 = vector.broadcast %3 : vector<1x16xf32> to vector<8x16xf32>
    %5 = arith.addf %2, %4 : vector<8x16xf32>
    %c0_5 = arith.constant 0 : index
    %c0_6 = arith.constant 0 : index
    %6 = vector.load %arg3[%c0_5, %c0_6] : memref<8x16xf32, #tpu.memory_space<vmem>>, vector<8x16xf32>
    tpu.vector_store %arg3[%c0_5, %c0_6], %5 {strides = array<i32>} : memref<8x16xf32, #tpu.memory_space<vmem>>, vector<8x16xf32>,
    return
  }
}

</mosaic_0001>

<llo_original>
// kernel: tpu_custom_call.1
$region0: #{tpu_custom_call.1}
  #allocation0 [shape = 'u32[]', space=smem, size = 0x4, offset = 0x4, fixed_abs, tag = 'smem constant byte address 0x4 - core index']
  #allocation1 [shape = 'u32[144,128]{1,0:T(1,128)}', space=vmem, size = 0x12000, scoped, tag = 'internal scratch']
  %s0 = inlined_call_operand.vmem [shape: f32[8,32], index: 0, kind: input, shape index: {}]
  %s1 = inlined_call_operand.vmem [shape: f32[32,16], index: 1, kind: input, shape index: {}]
  %s2 = inlined_call_operand.vmem [shape: f32[1,16], index: 2, kind: input, shape index: {}]
  %s3 = inlined_call_operand.hbm [shape: f32[8,16], index: 3, kind: output, shape index: {}]
  %s4 = sld [smem:[#allocation0]]
  $region22: #{tpu_custom_call.1} parent=0
    _
  %s6 = ssub.s32 1, %s4
  %s7 = scalar_select 0, %s6, %s4
  $region1: #{tpu_custom_call.1} parent=0
    #allocation2 [shape = 'u8[4096]{0}', space=vmem, size = 0x1000, scoped, tag = 'output window, operand 0, single buffered']
    #allocation3 [shape = 's32[1]{0}', space=sflag, size = 0x4, scoped, tag = 'scoped memory for tpu_custom_call.1']
    %8 = vsyncpa [#allocation3], 0
    // Predicated region
    $region2: #{tpu_custom_call.1} parent=1 // pred_check
      _
    $region3: #{tpu_custom_call.1} parent=1 // pred_check_branch
      %10 = sbr.rel (0) target = $region5
    $region4: #{tpu_custom_call.1} parent=1 // pred_region
      _
    $region5: #{tpu_custom_call.1} parent=1 // pred_fallthru
      _
    // Predicated region
    $region6: #{tpu_custom_call.1} parent=1 // pred_check
      _
    $region7: #{tpu_custom_call.1} parent=1 // pred_check_branch
      %12 = sbr.rel (0) target = $region9
    $region8: #{tpu_custom_call.1} parent=1 // pred_region
      _
    $region9: #{tpu_custom_call.1} parent=1 // pred_fallthru
      _
    // Predicated region
    $region10: #{tpu_custom_call.1} parent=1 // pred_check
      _
    $region11: #{tpu_custom_call.1} parent=1 // pred_check_branch
      %14 = sbr.rel (0) target = $region13
    $region12: #{tpu_custom_call.1} parent=1 // pred_region
      _
    $region13: #{tpu_custom_call.1} parent=1 // pred_fallthru
      _
    %v15 = vld [vmem:[%s0] sm:$0xff]
    %v16 = vld [vmem:[%s1] sm:$0xff]
    %v17 = vld [vmem:[%s1 + $0x8] sm:$0xff]
    %v18 = vld [vmem:[%s1 + $0x10] sm:$0xff]
    %v19 = vld [vmem:[%s1 + $0x18] sm:$0xff]
    %v20 = vld [vmem:[%s2] sm:$0x1]
    %v22 = vlaneseq
    %v23 = vshrl.u32 %v22, 7
    %v24 = vsub.s32 0, %v23
    %v25 = vrot.slane %v20, %v24
    %vm27 = vcmask 261120
    %v29 = vsel %vm27, %v15, 0
    %31 = vmatprep.subr.mxu0 0.0
    %32 = vmatpush1.msra.mxu0 %v16
    %33 = vmatprep.subr.mxu0 0.0
    %34 = vmatpush1.msra.mxu0 %v17
    %35 = vmatprep.subr.mxu0 0.0
    %36 = vmatpush1.msra.mxu0 %v18
    %37 = vmatprep.subr.mxu0 0.0
    %38 = vmatpush1.msra.mxu0 %v19
    %39 = vmatprep.subr.mxu0 0.0
    %40 = vmatpush1.msra.mxu0 0.0
    %41 = vmatprep.subr.mxu0 0.0
    %42 = vmatpush1.msra.mxu0 0.0
    %43 = vmatprep.subr.mxu0 0.0
    %44 = vmatpush1.msra.mxu0 0.0
    %45 = vmatprep.subr.mxu0 0.0
    %46 = vmatpush1.msra.mxu0 0.0
    %47 = vmatprep.subr.mxu0 0.0
    %48 = vmatpush1.msra.mxu0 0.0
    %49 = vmatprep.subr.mxu0 0.0
    %50 = vmatpush1.msra.mxu0 0.0
    %51 = vmatprep.subr.mxu0 0.0
    %52 = vmatpush1.msra.mxu0 0.0
    %53 = vmatprep.subr.mxu0 0.0
    %54 = vmatpush1.msra.mxu0 0.0
    %55 = vmatprep.subr.mxu0 0.0
    %56 = vmatpush1.msra.mxu0 0.0
    %57 = vmatprep.subr.mxu0 0.0
    %58 = vmatpush1.msra.mxu0 0.0
    %59 = vmatprep.subr.mxu0 0.0
    %60 = vmatpush1.msra.mxu0 0.0
    %61 = vmatprep.subr.mxu0 0.0
    %62 = vmatpush1.msra.mxu0 0.0
    %63 = vmatprep.subr.mxu0 0.0
    %64 = vmatpush1.msra.mxu0 0.0
    %65 = vmatprep.subr.mxu0 0.0
    %66 = vmatpush1.msra.mxu0 0.0
    %67 = vmatprep.subr.mxu0 0.0
    %68 = vmatpush1.msra.mxu0 0.0
    %69 = vmatprep.subr.mxu0 0.0
    %70 = vmatpush1.msra.mxu0 0.0
    %71 = vmatprep.subr.mxu0 0.0
    %72 = vmatpush1.msra.mxu0 0.0
    %73 = vmatprep.subr.mxu0 0.0
    %74 = vmatpush1.msra.mxu0 0.0
    %75 = vmatprep.subr.mxu0 0.0
    %76 = vmatpush1.msra.mxu0 0.0
    %77 = vmatprep.subr.mxu0 0.0
    %78 = vmatpush1.msra.mxu0 0.0
    %79 = vmatprep.subr.mxu0 0.0
    %80 = vmatpush1.msra.mxu0 0.0
    %81 = vmatprep.subr.mxu0 0.0
    %82 = vmatpush1.msra.mxu0 0.0
    %83 = vmatprep.subr.mxu0 0.0
    %84 = vmatpush1.msra.mxu0 0.0
    %85 = vmatprep.subr.mxu0 0.0
    %86 = vmatpush1.msra.mxu0 0.0
    %87 = vmatprep.subr.mxu0 0.0
    %88 = vmatpush1.msra.mxu0 0.0
    %89 = vmatprep.subr.mxu0 0.0
    %90 = vmatpush1.msra.mxu0 0.0
    %91 = vmatprep.subr.mxu0 0.0
    %92 = vmatpush1.msra.mxu0 0.0
    %93 = vmatprep.subr.mxu0 0.0
    %94 = vmatpush1.msra.mxu0 0.0
    %95 = vmatprep.mubr.f32.mxu0 0.0
    %96 = vmatmul.mubr.f32.gmra.mrb[0].mxu0 %v29
    %v97 = vpop.f32.mrb[0].mxu0
    %v98 = vadd.f32 %v25, %v97
    %v99 = vpop.f32.mrb[0].mxu0
    %100 = vdwg.mxu0
    %vm101 = vcmask 130048
    %102 = vst.msk [vmem:[#allocation2] sm:$0xff] %vm101, %v98
    // Predicated region
    $region14: #{tpu_custom_call.1} parent=1 // pred_check
      _
    $region15: #{tpu_custom_call.1} parent=1 // pred_check_branch
      %104 = sbr.rel (0) target = $region17
    $region16: #{tpu_custom_call.1} parent=1 // pred_region
      %s106 = ssub.s32 128, 128
      %107 = vsyncadd [#allocation3], %s106
      %s109 = sshll.u32 [#allocation2], 4
      %s110 = int_to_ptr.vmem [resolvable:$true] %s109
      %112 = dma.vmem_to_hbm [thread:$0]  %s110, 128, %s3, [#allocation3]
    $region17: #{tpu_custom_call.1} parent=1 // pred_fallthru
      _
    // Predicated region
    $region18: #{tpu_custom_call.1} parent=1 // pred_check
      _
    $region19: #{tpu_custom_call.1} parent=1 // pred_check_branch
      %114 = sbr.rel (0) target = $region21
    $region20: #{tpu_custom_call.1} parent=1 // pred_region
      %115 = dma.done [#allocation3], 128
    $region21: #{tpu_custom_call.1} parent=1 // pred_fallthru
      _
    %116 = vsyncpa [#allocation3], 1

</llo_original>
